<compile_context>
chip_gen: v7x
topology: tpu7x:2x2x1
jax: 0.10.0
libtpu: 0.0.40
codegen_flags: <defaults>
</compile_context>

<pallas_src>
import functools
import numpy as np

import jax
import jax.numpy as jnp
from jax.experimental import pallas as pl
from jax.experimental.pallas import tpu as pltpu

_DEFAULT_VMEM_CAP = 64 * 1024 * 1024   # conservative fallback (v7x per-TensorCore VMEM)
_MAX_TILE_M = 4096


# ----------------------------------- kernel -----------------------------------

def _apply_activation(acc, activation):
    if activation == "none":
        return acc
    if activation == "relu":
        return jnp.maximum(acc, 0.0)
    if activation == "lrelu":
        return jnp.where(acc >= 0.0, acc, 0.2 * acc)   # nn.LeakyReLU(0.2) per module spec
    if activation == "sigmoid":
        return jax.nn.sigmoid(acc)
    if activation == "tanh":
        return jnp.tanh(acc)
    raise ValueError(f"unknown activation: {activation}")


def _linear_block_kernel(x_ref, w_ref, b_ref, o_ref, acc_ref, *, activation):
    k = pl.program_id(2)                               # reduction axis is always last

    @pl.when(k == 0)
    def _init():
        acc_ref[...] = jnp.zeros_like(acc_ref)

    x = x_ref[...]                                     # [tile_m, tile_k]  (input dtype)
    w = w_ref[...]                                     # [tile_n, tile_k]  (torch layout kept)
    if x.shape[1] == 1:                                # degenerate K==1: outer product on VPU
        acc_ref[...] += x.astype(jnp.float32) * w.reshape(1, -1).astype(jnp.float32)
    else:
        acc_ref[...] += jax.lax.dot_general(
            x, w,
            dimension_numbers=(((1,), (1,)), ((), ())),   # contract last dims: x @ w.T
            preferred_element_type=jnp.float32)

    @pl.when(k == pl.num_programs(2) - 1)
    def _finalize():
        acc = acc_ref[...] + b_ref[...].astype(jnp.float32)   # [1, tile_n] broadcast
        acc = _apply_activation(acc, activation)
        o_ref[...] = acc.astype(o_ref.dtype)


# ----------------------------------- tiling -----------------------------------

def _round_up(v, m):
    return ((v + m - 1) // m) * m


def _vmem_budget():
    """(tile working-set budget, scoped vmem limit) from the actual chip's VMEM capacity."""
    cap = _DEFAULT_VMEM_CAP
    try:
        info = pltpu.get_tpu_info()
        cap_attr = getattr(info, "vmem_capacity_bytes", None)
        if cap_attr:
            cap = int(cap_attr)
    except Exception:
        pass
    return int(cap * 0.70), int(cap * 0.85)


def _pick_tile_n(N):
    # Full extent when small (no (8,128) constraint); otherwise a 256-aligned 1024-wide tile
    # (full MXU width on v6e/v7x); cdiv grid masks a ragged last block.
    return N if N <= 1024 else 1024


def _pick_tile_k(K, tile_n, itemsize, budget):
    """Pick tile_k so the double-buffered weight slab stays under ~1/3 of the budget.

    Returns (tile_k, K_pad); K_pad != K only for the rare case of a non-128-multiple K that
    must be tiled (the wrapper zero-pads, which does not change the matmul).
    """
    max_k = max((budget // 3) // (2 * tile_n * itemsize), 128)
    if K <= max_k:
        return K, K                                     # full K in one block
    K_pad = _round_up(K, 128)
    for t in (2048, 1024, 512, 256, 128):
        if t <= max_k and K_pad % t == 0:
            return t, K_pad
    return 128, K_pad


def _pick_tile_m(M, tile_k, tile_n, in_item, out_item, budget):
    """Largest row tile whose real double-buffered footprint fits the budget."""
    fixed = 2 * tile_n * tile_k * in_item + 2 * tile_n * in_item        # weight + bias (2 bufs)
    per_row = 2 * tile_k * in_item + 2 * tile_n * out_item + 4 * tile_n  # x + out (2 bufs) + acc
    avail = max(budget - fixed, per_row * 8)
    tile_m = min(avail // per_row, _MAX_TILE_M)
    if tile_m >= M:
        return M                                        # single full-extent block, no padding
    if tile_m >= 256:
        return (tile_m // 256) * 256                    # 256-aligned (v6e/v7x MXU is 2x256x256)
    return max((tile_m // 8) * 8, 8)


# ----------------------------------- wrapper -----------------------------------

@functools.partial(jax.jit, static_argnames=("activation",))
def linear_block_forward(x, weight, bias, activation="none"):
    """LinearBlock.forward: activation(x @ weight.T + bias).

    x:      [..., in_features]
    weight: [out_features, in_features]  (torch nn.Linear layout, kept as-is)
    bias:   [out_features]
    """
    *lead, K = x.shape
    N = int(weight.shape[0])
    M = int(np.prod(lead)) if lead else 1
    dtype = x.dtype

    x2 = x.reshape(M, K)
    w = weight.astype(dtype)                 # no-op when dtypes already match; no transpose
    b = bias.reshape(1, N).astype(dtype)

    in_item = jnp.dtype(dtype).itemsize
    out_item = in_item

    budget, vmem_limit = _vmem_budget()
    tile_n = _pick_tile_n(N)
    tile_k, K_pad = _pick_tile_k(K, tile_n, in_item, budget)
    if K_pad != K:
        # TODO(synk): rare case (K not a multiple of 128 and too large for one block) — zero-pad
        # the contraction dim once; zeros do not change the result.
        x2 = jnp.pad(x2, ((0, 0), (0, K_pad - K)))
        w = jnp.pad(w, ((0, 0), (0, K_pad - K)))
    tile_m = _pick_tile_m(M, tile_k, tile_n, in_item, out_item, budget)

    grid_m = pl.cdiv(M, tile_m)
    grid_n = pl.cdiv(N, tile_n)
    grid_k = K_pad // tile_k

    # Guarantee >=2 steps on a parallel axis when M is large so v7x's two TensorCores both work.
    if grid_m * grid_n == 1 and M >= 512:
        tile_m = _round_up(pl.cdiv(M, 2), 256)
        grid_m = pl.cdiv(M, tile_m)

    # Grid-axis order: keep the larger operand resident across the inner sweep.
    swap = (N * K_pad) > (M * K_pad)          # weight bytes > activation bytes -> N axis outer
    if swap:
        grid = (grid_n, grid_m, grid_k)
        x_map = lambda j, i, k: (i, k)
        w_map = lambda j, i, k: (j, k)
        b_map = lambda j, i, k: (0, j)
        o_map = lambda j, i, k: (i, j)
    else:
        grid = (grid_m, grid_n, grid_k)
        x_map = lambda i, j, k: (i, k)
        w_map = lambda i, j, k: (j, k)
        b_map = lambda i, j, k: (0, j)
        o_map = lambda i, j, k: (i, j)

    out = pl.pallas_call(
        functools.partial(_linear_block_kernel, activation=activation),
        out_shape=jax.ShapeDtypeStruct((M, N), dtype),
        grid_spec=pltpu.PrefetchScalarGridSpec(
            num_scalar_prefetch=0,
            grid=grid,
            in_specs=[pl.BlockSpec((tile_m, tile_k), x_map),
                      pl.BlockSpec((tile_n, tile_k), w_map),
                      pl.BlockSpec((1, tile_n), b_map)],
            out_specs=pl.BlockSpec((tile_m, tile_n), o_map),
            scratch_shapes=[pltpu.VMEM((tile_m, tile_n), jnp.float32)]),
        compiler_params=pltpu.CompilerParams(
            dimension_semantics=("parallel", "parallel", "arbitrary"),
            vmem_limit_bytes=vmem_limit),
        cost_estimate=pl.CostEstimate(
            flops=2 * M * K * N,
            transcendentals=(M * N) if activation in ("sigmoid", "tanh") else 0,
            bytes_accessed=in_item * (M * K + N * K + N) + out_item * M * N),
    )(x2, w, b)

    return out.reshape(*lead, N)


# -------------------------------- reference + init --------------------------------

def linear_block_reference(x, weight, bias, activation):
    y = jnp.einsum("...k,nk->...n", x, weight) + bias
    return _apply_activation(y, activation)


def init_linear_block_params(key, in_features, out_features):
    kw, kb = jax.random.split(key)
    bound = 1.0 / np.sqrt(in_features)
    weight = jax.random.uniform(kw, (out_features, in_features), jnp.float32, -bound, bound)
    bias = jax.random.uniform(kb, (out_features,), jnp.float32, -bound, bound)
    return weight, bias


# ----------------------------------- main -----------------------------------

if __name__ == "__main__":
    key = jax.random.PRNGKey(0)
    kx, kp, kx2, kp2 = jax.random.split(key, 4)

    # Primary small test: batch=2, seq=8, in_features=32, out_features=128, lrelu.
    batch, seq, in_features, out_features = 2, 8, 32, 128
    activation = "lrelu"

    x = jax.random.normal(kx, (batch, seq, in_features), jnp.float32)
    weight, bias = init_linear_block_params(kp, in_features, out_features)

    out = linear_block_forward(x, weight, bias, activation=activation)
    out = jax.block_until_ready(out)

    assert out.shape == (batch, seq, out_features), out.shape
    assert bool(jnp.all(jnp.isfinite(out)))
    ref = linear_block_reference(x, weight, bias, activation)
    np.testing.assert_allclose(np.asarray(out), np.asarray(ref), rtol=1e-5, atol=1e-5)

    # Secondary check: wide output (N > 1024) to exercise the tiled-N / multi-block grid path.
    x2 = jax.random.normal(kx2, (4, 8, 64), jnp.float32)
    w2, b2 = init_linear_block_params(kp2, 64, 2048)
    out2 = jax.block_until_ready(linear_block_forward(x2, w2, b2, activation="sigmoid"))
    ref2 = linear_block_reference(x2, w2, b2, "sigmoid")
    np.testing.assert_allclose(np.asarray(out2), np.asarray(ref2), rtol=1e-5, atol=1e-5)

    print("KERNEL_OK")
</pallas_src>

<mosaic_0001>
module attributes {stable_mosaic.version = 11 : i64} {
  func.func @_linear_block_kernel(%arg0: i32, %arg1: i32, %arg2: i32, %arg3: memref<16x32xf32, #tpu.memory_space<vmem>>, %arg4: memref<128x32xf32, #tpu.memory_space<vmem>>, %arg5: memref<1x128xf32, #tpu.memory_space<vmem>>, %arg6: memref<16x128xf32, #tpu.memory_space<vmem>>, %arg7: memref<16x128xf32, #tpu.memory_space<vmem>>) attributes {dimension_semantics = [#tpu.dimension_semantics<parallel>, #tpu.dimension_semantics<parallel>, #tpu.dimension_semantics<arbitrary>], iteration_bounds = array<i64: 1, 1, 1>, scalar_prefetch = 0 : i64, scratch_operands = 1 : i64, tpu.core_type = #tpu.core_type<tc>, window_params = [{transform_indices = @transform_0, window_bounds = array<i64: 16, 32>}, {transform_indices = @transform_1, window_bounds = array<i64: 128, 32>}, {transform_indices = @transform_2, window_bounds = array<i64: 1, 128>}, {transform_indices = @transform_3, window_bounds = array<i64: 16, 128>}]} {
    %c0_i32 = arith.constant 0 : i32
    %0 = arith.cmpi eq, %arg2, %c0_i32 : i32
    %1 = arith.extui %0 : i1 to i32
    %c0_i32_0 = arith.constant 0 : i32
    %2 = arith.cmpi ne, %1, %c0_i32_0 : i32
    scf.if %2 {
      %cst_10 = arith.constant 0.000000e+00 : f32
      %12 = vector.broadcast %cst_10 : f32 to vector<16x128xf32>
      %c0_11 = arith.constant 0 : index
      %c0_12 = arith.constant 0 : index
      %13 = vector.load %arg7[%c0_11, %c0_12] : memref<16x128xf32, #tpu.memory_space<vmem>>, vector<16x128xf32>
      tpu.vector_store %arg7[%c0_11, %c0_12], %12 {strides = array<i32>} : memref<16x128xf32, #tpu.memory_space<vmem>>, vector<16x128xf32>,
    } else {
    }
    %c0 = arith.constant 0 : index
    %c0_1 = arith.constant 0 : index
    %3 = vector.load %arg3[%c0, %c0_1] : memref<16x32xf32, #tpu.memory_space<vmem>>, vector<16x32xf32>
    %c0_2 = arith.constant 0 : index
    %c0_3 = arith.constant 0 : index
    %4 = vector.load %arg4[%c0_2, %c0_3] : memref<128x32xf32, #tpu.memory_space<vmem>>, vector<128x32xf32>
    %c0_4 = arith.constant 0 : index
    %c0_5 = arith.constant 0 : index
    %5 = vector.load %arg7[%c0_4, %c0_5] : memref<16x128xf32, #tpu.memory_space<vmem>>, vector<16x128xf32>
    %cst = arith.constant dense<0.000000e+00> : vector<16x128xf32>
    %6 = tpu.matmul %3, %4, %cst {dimension_numbers = #tpu.dot_dimension_numbers<[1], [1], [0], [0], [0, 0, 1, 0], [], []>} : vector<16x32xf32>, vector<128x32xf32>, vector<16x128xf32> -> vector<16x128xf32>
    %7 = arith.addf %5, %6 : vector<16x128xf32>
    %c0_6 = arith.constant 0 : index
    %c0_7 = arith.constant 0 : index
    %8 = vector.load %arg7[%c0_6, %c0_7] : memref<16x128xf32, #tpu.memory_space<vmem>>, vector<16x128xf32>
    tpu.vector_store %arg7[%c0_6, %c0_7], %7 {strides = array<i32>} : memref<16x128xf32, #tpu.memory_space<vmem>>, vector<16x128xf32>,
    %c0_i32_8 = arith.constant 0 : i32
    %9 = arith.cmpi eq, %arg2, %c0_i32_8 : i32
    %10 = arith.extui %9 : i1 to i32
    %c0_i32_9 = arith.constant 0 : i32
    %11 = arith.cmpi ne, %10, %c0_i32_9 : i32
    scf.if %11 {
      %c0_10 = arith.constant 0 : index
      %c0_11 = arith.constant 0 : index
      %12 = vector.load %arg7[%c0_10, %c0_11] : memref<16x128xf32, #tpu.memory_space<vmem>>, vector<16x128xf32>
      %c0_12 = arith.constant 0 : index
      %c0_13 = arith.constant 0 : index
      %13 = vector.load %arg5[%c0_12, %c0_13] : memref<1x128xf32, #tpu.memory_space<vmem>>, vector<1x128xf32>
      %14 = vector.broadcast %13 : vector<1x128xf32> to vector<16x128xf32>
      %15 = arith.addf %12, %14 : vector<16x128xf32>
      %cst_14 = arith.constant 0.000000e+00 : f32
      %16 = vector.broadcast %cst_14 : f32 to vector<16x128xf32>
      %17 = arith.cmpf oge, %15, %16 : vector<16x128xf32>
      %cst_15 = arith.constant 2.000000e-01 : f32
      %18 = vector.broadcast %cst_15 : f32 to vector<16x128xf32>
      %19 = arith.mulf %18, %15 : vector<16x128xf32>
      %20 = arith.select %17, %15, %19 : vector<16x128xi1>, vector<16x128xf32>
      %c0_16 = arith.constant 0 : index
      %c0_17 = arith.constant 0 : index
      %21 = vector.load %arg6[%c0_16, %c0_17] : memref<16x128xf32, #tpu.memory_space<vmem>>, vector<16x128xf32>
      tpu.vector_store %arg6[%c0_16, %c0_17], %20 {strides = array<i32>} : memref<16x128xf32, #tpu.memory_space<vmem>>, vector<16x128xf32>,
    } else {
    }
    return
  }
  func.func @transform_0(%arg0: i32, %arg1: i32, %arg2: i32) -> (i32, i32) {
    %c0_i32 = arith.constant 0 : i32
    return %arg1, %arg2 : i32, i32
  }
  func.func @transform_1(%arg0: i32, %arg1: i32, %arg2: i32) -> (i32, i32) {
    %c0_i32 = arith.constant 0 : i32
    return %arg0, %arg2 : i32, i32
  }
  func.func @transform_2(%arg0: i32, %arg1: i32, %arg2: i32) -> (i32, i32) {
    %c0_i32 = arith.constant 0 : i32
    %c0_i32_0 = arith.constant 0 : i32
    return %c0_i32, %arg0 : i32, i32
  }
  func.func @transform_3(%arg0: i32, %arg1: i32, %arg2: i32) -> (i32, i32) {
    %c0_i32 = arith.constant 0 : i32
    return %arg1, %arg0 : i32, i32
  }
}

</mosaic_0001>

<llo_original>
// kernel: linear_block_forward.1
$region0: #{linear_block_forward.1}
  #allocation0 [shape = 'u32[]', space=smem, size = 0x4, offset = 0x4, fixed_abs, tag = 'smem constant byte address 0x4 - core index']
  #allocation1 [shape = 'u32[144,128]{1,0:T(1,128)}', space=vmem, size = 0x12000, scoped, tag = 'internal scratch']
  #allocation2 [shape = 'f32[16,128]{1,0:T(8,128)}', space=vmem, size = 0x2000, scoped, tag = 'scratch operand']
  %s0 = inlined_call_operand.vmem [shape: f32[16,32], index: 0, kind: input, shape index: {}]
  %s1 = inlined_call_operand.vmem [shape: f32[128,32], index: 1, kind: input, shape index: {}]
  %s2 = inlined_call_operand.vmem [shape: f32[1,128], index: 2, kind: input, shape index: {}]
  %s3 = inlined_call_operand.hbm [shape: f32[16,128], index: 3, kind: output, shape index: {}]
  %s4 = sld [smem:[#allocation0]]
  $region30: #{linear_block_forward.1} parent=0
    _
  %s6 = ssub.s32 1, %s4
  %s7 = scalar_select 0, %s6, %s4
  $region1: #{linear_block_forward.1} parent=0
    #allocation3 [shape = 'u8[8192]{0}', space=vmem, size = 0x2000, scoped, tag = 'output window, operand 0, single buffered']
    #allocation4 [shape = 's32[1]{0}', space=sflag, size = 0x4, scoped, tag = 'scoped memory for linear_block_forward.1']
    %8 = vsyncpa [#allocation4], 0
    // Predicated region
    $region2: #{linear_block_forward.1} parent=1 // pred_check
      _
    $region3: #{linear_block_forward.1} parent=1 // pred_check_branch
      %10 = sbr.rel (0) target = $region5
    $region4: #{linear_block_forward.1} parent=1 // pred_region
      _
    $region5: #{linear_block_forward.1} parent=1 // pred_fallthru
      _
    // Predicated region
    $region6: #{linear_block_forward.1} parent=1 // pred_check
      _
    $region7: #{linear_block_forward.1} parent=1 // pred_check_branch
      %12 = sbr.rel (0) target = $region9
    $region8: #{linear_block_forward.1} parent=1 // pred_region
      _
    $region9: #{linear_block_forward.1} parent=1 // pred_fallthru
      _
    // Predicated region
    $region10: #{linear_block_forward.1} parent=1 // pred_check
      _
    $region11: #{linear_block_forward.1} parent=1 // pred_check_branch
      %14 = sbr.rel (0) target = $region13
    $region12: #{linear_block_forward.1} parent=1 // pred_region
      _
    $region13: #{linear_block_forward.1} parent=1 // pred_fallthru
      _
    %p15 = scmp.eq.s32.totalorder 0, 0
    // Predicated region
    $region14: #{linear_block_forward.1} parent=1 // pred_check
      %p16 = pneg %p15
    $region15: #{linear_block_forward.1} parent=1 // pred_check_branch
      %18 = sbr.rel (%p16) target = $region17
    $region16: #{linear_block_forward.1} parent=1 // pred_region
      %19 = vst [vmem:[#allocation2] sm:$0xff] 0.0
      %20 = vst [vmem:[#allocation2 + $0x8] sm:$0xff] 0.0
    $region17: #{linear_block_forward.1} parent=1 // pred_fallthru
      _
    %v21 = vld [vmem:[%s0] sm:$0xff]
    %v22 = vld [vmem:[%s0 + $0x8] sm:$0xff]
    %v23 = vld [vmem:[%s1] sm:$0xff]
    %v24 = vld [vmem:[%s1 + $0x8] sm:$0xff]
    %v25 = vld [vmem:[%s1 + $0x10] sm:$0xff]
    %v26 = vld [vmem:[%s1 + $0x18] sm:$0xff]
    %v27 = vld [vmem:[%s1 + $0x20] sm:$0xff]
    %v28 = vld [vmem:[%s1 + $0x28] sm:$0xff]
    %v29 = vld [vmem:[%s1 + $0x30] sm:$0xff]
    %v30 = vld [vmem:[%s1 + $0x38] sm:$0xff]
    %v31 = vld [vmem:[%s1 + $0x40] sm:$0xff]
    %v32 = vld [vmem:[%s1 + $0x48] sm:$0xff]
    %v33 = vld [vmem:[%s1 + $0x50] sm:$0xff]
    %v34 = vld [vmem:[%s1 + $0x58] sm:$0xff]
    %v35 = vld [vmem:[%s1 + $0x60] sm:$0xff]
    %v36 = vld [vmem:[%s1 + $0x68] sm:$0xff]
    %v37 = vld [vmem:[%s1 + $0x70] sm:$0xff]
    %v38 = vld [vmem:[%s1 + $0x78] sm:$0xff]
    %v39 = vld [vmem:[#allocation2] sm:$0xff]
    %v40 = vld [vmem:[#allocation2 + $0x8] sm:$0xff]
    %vm41 = vcmask 261120
    %v43 = vsel %vm41, %v21, 0
    %v46 = vsel %vm41, %v22, 0
    %v49 = vsel %vm41, %v23, 0
    %v52 = vsel %vm41, %v24, 0
    %v55 = vsel %vm41, %v25, 0
    %v58 = vsel %vm41, %v26, 0
    %v61 = vsel %vm41, %v27, 0
    %v64 = vsel %vm41, %v28, 0
    %v67 = vsel %vm41, %v29, 0
    %v70 = vsel %vm41, %v30, 0
    %v73 = vsel %vm41, %v31, 0
    %v76 = vsel %vm41, %v32, 0
    %v79 = vsel %vm41, %v33, 0
    %v82 = vsel %vm41, %v34, 0
    %v85 = vsel %vm41, %v35, 0
    %v88 = vsel %vm41, %v36, 0
    %v91 = vsel %vm41, %v37, 0
    %v94 = vsel %vm41, %v38, 0
    %96 = vmatprep.subr.mxu0 0.0
    %97 = vmatpush1.xpose.msra.mxu0 %v49
    %98 = vmatprep.subr.mxu0 0.0
    %99 = vmatpush1.xpose.msra.mxu0 %v52
    %100 = vmatprep.subr.mxu0 0.0
    %101 = vmatpush1.xpose.msra.mxu0 %v55
    %102 = vmatprep.subr.mxu0 0.0
    %103 = vmatpush1.xpose.msra.mxu0 %v58
    %104 = vmatprep.subr.mxu0 0.0
    %105 = vmatpush1.xpose.msra.mxu0 %v61
    %106 = vmatprep.subr.mxu0 0.0
    %107 = vmatpush1.xpose.msra.mxu0 %v64
    %108 = vmatprep.subr.mxu0 0.0
    %109 = vmatpush1.xpose.msra.mxu0 %v67
    %110 = vmatprep.subr.mxu0 0.0
    %111 = vmatpush1.xpose.msra.mxu0 %v70
    %112 = vmatprep.subr.mxu0 0.0
    %113 = vmatpush1.xpose.msra.mxu0 %v73
    %114 = vmatprep.subr.mxu0 0.0
    %115 = vmatpush1.xpose.msra.mxu0 %v76
    %116 = vmatprep.subr.mxu0 0.0
    %117 = vmatpush1.xpose.msra.mxu0 %v79
    %118 = vmatprep.subr.mxu0 0.0
    %119 = vmatpush1.xpose.msra.mxu0 %v82
    %120 = vmatprep.subr.mxu0 0.0
    %121 = vmatpush1.xpose.msra.mxu0 %v85
    %122 = vmatprep.subr.mxu0 0.0
    %123 = vmatpush1.xpose.msra.mxu0 %v88
    %124 = vmatprep.subr.mxu0 0.0
    %125 = vmatpush1.xpose.msra.mxu0 %v91
    %126 = vmatprep.subr.mxu0 0.0
    %127 = vmatpush1.xpose.msra.mxu0 %v94
    %128 = vmatprep.subr.mxu0 0.0
    %129 = vmatpush1.xpose.msra.mxu0 0.0
    %130 = vmatprep.subr.mxu0 0.0
    %131 = vmatpush1.xpose.msra.mxu0 0.0
    %132 = vmatprep.subr.mxu0 0.0
    %133 = vmatpush1.xpose.msra.mxu0 0.0
    %134 = vmatprep.subr.mxu0 0.0
    %135 = vmatpush1.xpose.msra.mxu0 0.0
    %136 = vmatprep.subr.mxu0 0.0
    %137 = vmatpush1.xpose.msra.mxu0 0.0
    %138 = vmatprep.subr.mxu0 0.0
    %139 = vmatpush1.xpose.msra.mxu0 0.0
    %140 = vmatprep.subr.mxu0 0.0
    %141 = vmatpush1.xpose.msra.mxu0 0.0
    %142 = vmatprep.subr.mxu0 0.0
    %143 = vmatpush1.xpose.msra.mxu0 0.0
    %144 = vmatprep.subr.mxu0 0.0
    %145 = vmatpush1.xpose.msra.mxu0 0.0
    %146 = vmatprep.subr.mxu0 0.0
    %147 = vmatpush1.xpose.msra.mxu0 0.0
    %148 = vmatprep.subr.mxu0 0.0
    %149 = vmatpush1.xpose.msra.mxu0 0.0
    %150 = vmatprep.subr.mxu0 0.0
    %151 = vmatpush1.xpose.msra.mxu0 0.0
    %152 = vmatprep.subr.mxu0 0.0
    %153 = vmatpush1.xpose.msra.mxu0 0.0
    %154 = vmatprep.subr.mxu0 0.0
    %155 = vmatpush1.xpose.msra.mxu0 0.0
    %156 = vmatprep.subr.mxu0 0.0
    %157 = vmatpush1.xpose.msra.mxu0 0.0
    %158 = vmatprep.subr.mxu0 0.0
    %159 = vmatpush1.xpose.msra.mxu0 0.0
    %160 = vmatprep.mubr.f32.mxu0 0.0
    %161 = vmatmul.mubr.f32.gmra.mrb[0].mxu0 %v43
    %v162 = vpop.f32.mrb[0].mxu0
    %v163 = vadd.f32 0.0, %v162
    %v164 = vpop.f32.mrb[0].mxu0
    %165 = vmatprep.mubr.f32.mxu0 0.0
    %166 = vmatmul.mubr.f32.gmra.mrb[0].mxu0 %v46
    %v167 = vpop.f32.mrb[0].mxu0
    %v168 = vadd.f32 0.0, %v167
    %v169 = vpop.f32.mrb[0].mxu0
    %170 = vdwg.mxu0
    %v171 = vadd.f32 %v39, %v163
    %v172 = vadd.f32 %v40, %v168
    %173 = vst [vmem:[#allocation2] sm:$0xff] %v171
    %174 = vst [vmem:[#allocation2 + $0x8] sm:$0xff] %v172
    // Predicated region
    $region18: #{linear_block_forward.1} parent=1 // pred_check
      %p175 = pneg %p15
    $region19: #{linear_block_forward.1} parent=1 // pred_check_branch
      %177 = sbr.rel (%p175) target = $region21
    $region20: #{linear_block_forward.1} parent=1 // pred_region
      %v178 = vld [vmem:[#allocation2] sm:$0xff]
      %v179 = vld [vmem:[#allocation2 + $0x8] sm:$0xff]
      %v180 = vld [vmem:[%s2] sm:$0x1]
      %v182 = vlaneseq
      %v183 = vshrl.u32 %v182, 7
      %v184 = vsub.s32 0, %v183
      %v185 = vrot.slane %v180, %v184
      %v187 = vadd.f32 %v178, %v185
      %v188 = vadd.f32 %v179, %v185
      %vm189 = vcmp.ge.f32.partialorder %v187, 0.0
      %vm190 = vcmp.ge.f32.partialorder %v188, 0.0
      %v191 = vmul.f32 %v187, 0.2
      %v192 = vmul.f32 %v188, 0.2
      %v193 = vsel %vm189, %v187, %v191
      %v194 = vsel %vm190, %v188, %v192
      %195 = vst [vmem:[#allocation3] sm:$0xff] %v193
      %196 = vst [vmem:[#allocation3 + $0x8] sm:$0xff] %v194
    $region21: #{linear_block_forward.1} parent=1 // pred_fallthru
      _
    // Predicated region
    $region22: #{linear_block_forward.1} parent=1 // pred_check
      _
    $region23: #{linear_block_forward.1} parent=1 // pred_check_branch
      %198 = sbr.rel (0) target = $region25
    $region24: #{linear_block_forward.1} parent=1 // pred_region
      %s200 = ssub.s32 256, 256
      %201 = vsyncadd [#allocation4], %s200
      %s202 = sshll.u32 [#allocation3], 4
      %s203 = int_to_ptr.vmem [resolvable:$true] %s202
      %208 = dma.vmem_to_hbm [thread:$0]  %s203, 256, %s3, [#allocation4], 128, 128, 8
    $region25: #{linear_block_forward.1} parent=1 // pred_fallthru
      _
    // Predicated region
    $region26: #{linear_block_forward.1} parent=1 // pred_check
      _
    $region27: #{linear_block_forward.1} parent=1 // pred_check_branch
      %210 = sbr.rel (0) target = $region29
    $region28: #{linear_block_forward.1} parent=1 // pred_region
      %211 = dma.done [#allocation4], 256
    $region29: #{linear_block_forward.1} parent=1 // pred_fallthru
      _
    %212 = vsyncpa [#allocation4], 1

</llo_original>
